<compile_context>
chip_gen: v5e
topology: v5e:2x2
jax: 0.10.0
libtpu: 0.0.40
codegen_flags: <defaults>
</compile_context>

<pallas_src>
import functools

import jax
import jax.numpy as jnp
from jax.experimental import pallas as pl
from jax.experimental.pallas import tpu as pltpu


def _round_up(x, m):
    return ((x + m - 1) // m) * m


def _head_kernel(feat_ref, w_ref, b_ref, out_ref):
    # feat_ref: (TB, C*HW) f32   w_ref: (C*HW, c_pad) f32   b_ref: (1, c_pad) f32
    f = jnp.maximum(feat_ref[...], 0.0)                       # F.relu
    # relu -> (avg-pool folded into W') -> both linear heads in one MXU matmul.
    out_ref[...] = (
        jnp.dot(f, w_ref[...], preferred_element_type=jnp.float32) + b_ref[...]
    )


def multi_task_head(feature_nchw, w0, b0, w1, b1):
    """feature_nchw: (B, planes, Hf, Wf) float32, Hf == Wf == featmap.
    w0: (c0, planes), b0: (c0,), w1: (c1, planes), b1: (c1,)  (PyTorch Linear layout).
    Returns (out1, out2) = ((B, c0), (B, c1))."""
    B, C, Hf, Wf = feature_nchw.shape
    HW = Hf * Wf
    K = C * HW
    c0 = w0.shape[0]
    c1 = w1.shape[0]
    c_total = c0 + c1
    c_pad = _round_up(c_total, 128)          # lane-dense output / weight columns

    # ---- wrapper-side (one-time, tiny) weight prep: fold avg-pool + heads ----------
    # feature.reshape(B, C*HW) has index order c*HW + hw, so W'[c*HW+hw, j] = W[j,c]/HW.
    w_cat = jnp.concatenate([w0, w1], axis=0).astype(jnp.float32)        # (c_total, C)
    w_t = jnp.transpose(w_cat)                                            # (C, c_total)
    w_fused = (
        jnp.broadcast_to(w_t[:, None, :], (C, HW, c_total)).reshape(K, c_total) / HW
    )
    w_pad = jnp.pad(w_fused, ((0, 0), (0, c_pad - c_total)))             # (K, c_pad)
    b_cat = jnp.concatenate([b0, b1]).astype(jnp.float32)                # (c_total,)
    b_pad = jnp.pad(b_cat, (0, c_pad - c_total)).reshape(1, c_pad)       # (1, c_pad)

    # ---- feature: free contiguous reshape, no transpose ----------------------------
    feat = feature_nchw.reshape(B, K).astype(jnp.float32)                # (B, C*HW)

    # ---- batch tile sizing ----------------------------------------------------------
    # Keep the double-buffered feature tile <= ~8 MiB so it fits every generation's
    # scoped-VMEM default (v5e 16 MiB) with room for weights/outputs.
    tb_cap_vmem = max(8, ((8 * 1024 * 1024) // (2 * K * 4)) // 8 * 8)
    TB = max(8, min(512, _round_up(B, 8), tb_cap_vmem))
    B_pad = _round_up(B, TB)
    if B_pad != B:
        # Zero-pad the batch; relu(0)=0 -> padded rows only produce the bias, discarded.
        feat = jnp.pad(feat, ((0, B_pad - B), (0, 0)))
    n_tiles = B_pad // TB

    # ---- VMEM budget (double-buffered inputs/outputs) with headroom -----------------
    vmem_need = 2 * (TB * K + K * c_pad + TB * c_pad + c_pad) * 4
    vmem_limit = int(min(64 * 1024 * 1024, max(16 * 1024 * 1024, 2 * vmem_need)))

    cost = pl.CostEstimate(
        flops=2 * B_pad * K * c_pad,
        transcendentals=0,
        bytes_accessed=(B_pad * K + K * c_pad + c_pad + B_pad * c_pad) * 4,
    )

    out = pl.pallas_call(
        _head_kernel,
        out_shape=jax.ShapeDtypeStruct((B_pad, c_pad), jnp.float32),
        grid=(n_tiles,),
        in_specs=[
            pl.BlockSpec((TB, K), lambda i: (i, 0)),       # feature: tiled over batch
            pl.BlockSpec((K, c_pad), lambda i: (0, 0)),    # fused weight: VMEM-resident
            pl.BlockSpec((1, c_pad), lambda i: (0, 0)),    # fused bias: VMEM-resident
        ],
        out_specs=pl.BlockSpec((TB, c_pad), lambda i: (i, 0)),
        compiler_params=pltpu.CompilerParams(
            dimension_semantics=("parallel",),
            vmem_limit_bytes=vmem_limit,
        ),
        cost_estimate=cost,
    )(feat, w_pad, b_pad)

    out1 = out[:B, :c0]
    out2 = out[:B, c0:c_total]
    return out1, out2


def _reference(feature_nchw, w0, b0, w1, b1):
    B = feature_nchw.shape[0]
    f = jnp.maximum(feature_nchw, 0.0)
    pooled = jnp.mean(f, axis=(2, 3)).reshape(B, -1)
    return pooled @ w0.T + b0, pooled @ w1.T + b1


if __name__ == "__main__":
    # Small config consistent with name='rsn18', inmap=64, multi_classes=(3, 5):
    #   planes = 512, featmap = inmap // 32 = 2, batch = 2.
    B, planes, featmap = 2, 512, 2
    multi_classes = (3, 5)

    key = jax.random.PRNGKey(0)
    k_feat, k_w0, k_w1 = jax.random.split(key, 3)

    # Backbone feature map (stands in for self.base(x) output).
    feature = jax.random.normal(k_feat, (B, planes, featmap, featmap), dtype=jnp.float32)

    # initialize_cls_weights: nn.Linear -> weight ~ N(0, 0.01), bias = 0.
    w0 = 0.01 * jax.random.normal(k_w0, (multi_classes[0], planes), dtype=jnp.float32)
    b0 = jnp.zeros((multi_classes[0],), dtype=jnp.float32)
    w1 = 0.01 * jax.random.normal(k_w1, (multi_classes[1], planes), dtype=jnp.float32)
    b1 = jnp.zeros((multi_classes[1],), dtype=jnp.float32)

    out1, out2 = multi_task_head(feature, w0, b0, w1, b1)
    jax.block_until_ready((out1, out2))

    ref1, ref2 = _reference(feature, w0, b0, w1, b1)
    assert out1.shape == (B, multi_classes[0]) and out2.shape == (B, multi_classes[1])
    assert jnp.allclose(out1, ref1, atol=2e-5, rtol=1e-5)
    assert jnp.allclose(out2, ref2, atol=2e-5, rtol=1e-5)

    print("KERNEL_OK")
</pallas_src>

<mosaic_0001>
module attributes {stable_mosaic.version = 11 : i64} {
  func.func @_head_kernel(%arg0: i32, %arg1: memref<8x2048xf32, #tpu.memory_space<vmem>>, %arg2: memref<2048x128xf32, #tpu.memory_space<vmem>>, %arg3: memref<1x128xf32, #tpu.memory_space<vmem>>, %arg4: memref<8x128xf32, #tpu.memory_space<vmem>>) attributes {dimension_semantics = [#tpu.dimension_semantics<parallel>], iteration_bounds = array<i64: 1>, scalar_prefetch = 0 : i64, scratch_operands = 0 : i64, tpu.core_type = #tpu.core_type<tc>, window_params = [{transform_indices = @transform_0, window_bounds = array<i64: 8, 2048>}, {pipeline_mode = #tpu.pipeline_mode<synchronous>, transform_indices = @transform_1, window_bounds = array<i64: 2048, 128>}, {pipeline_mode = #tpu.pipeline_mode<synchronous>, transform_indices = @transform_2, window_bounds = array<i64: 1, 128>}, {transform_indices = @transform_3, window_bounds = array<i64: 8, 128>}]} {
    %c0 = arith.constant 0 : index
    %c0_0 = arith.constant 0 : index
    %0 = vector.load %arg1[%c0, %c0_0] : memref<8x2048xf32, #tpu.memory_space<vmem>>, vector<8x2048xf32>
    %cst = arith.constant 0.000000e+00 : f32
    %1 = vector.broadcast %cst : f32 to vector<8x2048xf32>
    %2 = arith.maximumf %0, %1 : vector<8x2048xf32>
    %c0_1 = arith.constant 0 : index
    %c0_2 = arith.constant 0 : index
    %3 = vector.load %arg2[%c0_1, %c0_2] : memref<2048x128xf32, #tpu.memory_space<vmem>>, vector<2048x128xf32>
    %cst_3 = arith.constant dense<0.000000e+00> : vector<8x128xf32>
    %4 = tpu.matmul %2, %3, %cst_3 {dimension_numbers = #tpu.dot_dimension_numbers<[1], [0], [0], [1], [0, 0, 1, 1], [], []>} : vector<8x2048xf32>, vector<2048x128xf32>, vector<8x128xf32> -> vector<8x128xf32>
    %c0_4 = arith.constant 0 : index
    %c0_5 = arith.constant 0 : index
    %5 = vector.load %arg3[%c0_4, %c0_5] : memref<1x128xf32, #tpu.memory_space<vmem>>, vector<1x128xf32>
    %6 = vector.broadcast %5 : vector<1x128xf32> to vector<8x128xf32>
    %7 = arith.addf %4, %6 : vector<8x128xf32>
    %c0_6 = arith.constant 0 : index
    %c0_7 = arith.constant 0 : index
    %8 = vector.load %arg4[%c0_6, %c0_7] : memref<8x128xf32, #tpu.memory_space<vmem>>, vector<8x128xf32>
    tpu.vector_store %arg4[%c0_6, %c0_7], %7 {strides = array<i32>} : memref<8x128xf32, #tpu.memory_space<vmem>>, vector<8x128xf32>,
    return
  }
  func.func @transform_0(%arg0: i32) -> (i32, i32) {
    %c0_i32 = arith.constant 0 : i32
    %c0_i32_0 = arith.constant 0 : i32
    return %arg0, %c0_i32 : i32, i32
  }
  func.func @transform_1(%arg0: i32) -> (i32, i32) {
    %c0_i32 = arith.constant 0 : i32
    %c0_i32_0 = arith.constant 0 : i32
    %c0_i32_1 = arith.constant 0 : i32
    return %c0_i32, %c0_i32_0 : i32, i32
  }
  func.func @transform_2(%arg0: i32) -> (i32, i32) {
    %c0_i32 = arith.constant 0 : i32
    %c0_i32_0 = arith.constant 0 : i32
    %c0_i32_1 = arith.constant 0 : i32
    return %c0_i32, %c0_i32_0 : i32, i32
  }
  func.func @transform_3(%arg0: i32) -> (i32, i32) {
    %c0_i32 = arith.constant 0 : i32
    %c0_i32_0 = arith.constant 0 : i32
    return %arg0, %c0_i32 : i32, i32
  }
}

</mosaic_0001>

<llo_original>
// kernel: tpu_custom_call.1
$region0: #{tpu_custom_call.1}
  #allocation0 [shape = 'u32[]', space=smem, size = 0x4, offset = 0x4, fixed_abs, tag = 'smem constant byte address 0x4 - core index']
  #allocation1 [shape = 'u32[72,128]{1,0:T(1,128)}', space=vmem, size = 0x9000, scoped, tag = 'internal scratch']
  %s0 = inlined_call_operand.hbm [shape: f32[8,2048], index: 0, kind: input, shape index: {}]
  %s1 = inlined_call_operand.hbm [shape: f32[2048,128], index: 1, kind: input, shape index: {}]
  %s2 = inlined_call_operand.vmem [shape: f32[1,128], index: 2, kind: input, shape index: {}]
  %s3 = inlined_call_operand.hbm [shape: f32[8,128], index: 3, kind: output, shape index: {}]
  %s4 = sld [smem:[#allocation0]]
  $region30: #{tpu_custom_call.1} parent=0
    _
  %s6 = ssub.s32 1, %s4
  %s7 = scalar_select 0, %s6, %s4
  $region1: #{tpu_custom_call.1} parent=0
    #allocation2 [shape = 'u8[65536]{0}', space=vmem, size = 0x10000, scoped, tag = 'input window, operand 0, single buffered']
    #allocation3 [shape = 's32[1]{0}', space=sflag, size = 0x4, scoped, tag = 'scoped memory for tpu_custom_call.1']
    #allocation4 [shape = 's32[1]{0}', space=sflag, size = 0x4, scoped, tag = 'scoped memory for tpu_custom_call.1']
    #allocation5 [shape = 'u8[1048576]{0}', space=vmem, size = 0x100000, scoped, tag = 'input window, operand 1, single buffered']
    #allocation6 [shape = 's32[1]{0}', space=sflag, size = 0x4, scoped, tag = 'scoped memory for tpu_custom_call.1']
    #allocation7 [shape = 'u8[4096]{0}', space=vmem, size = 0x1000, scoped, tag = 'output window, operand 0, single buffered']
    %8 = vsyncpa [#allocation3], 0
    %9 = vsyncpa [#allocation6], 0
    %10 = vsyncpa [#allocation4], 0
    // Predicated region
    $region2: #{tpu_custom_call.1} parent=1 // pred_check
      _
    $region3: #{tpu_custom_call.1} parent=1 // pred_check_branch
      %12 = sbr.rel (0) target = $region5
    $region4: #{tpu_custom_call.1} parent=1 // pred_region
      %14 = vsyncadd [#allocation3], 0
      %s16 = sshll.u32 %s0, 4
      %s17 = int_to_ptr.hbm [resolvable:$true] %s16
      %s18 = sshll.u32 [#allocation2], 4
      %s19 = int_to_ptr.vmem [resolvable:$true] %s18
      %21 = dma.hbm_to_vmem [thread:$0]  %s17, 2048, %s19, [#allocation3]
    $region5: #{tpu_custom_call.1} parent=1 // pred_fallthru
      _
    // Predicated region
    $region6: #{tpu_custom_call.1} parent=1 // pred_check
      _
    $region7: #{tpu_custom_call.1} parent=1 // pred_check_branch
      %23 = sbr.rel (0) target = $region9
    $region8: #{tpu_custom_call.1} parent=1 // pred_region
      %25 = vsyncadd [#allocation6], 0
      %s26 = sshll.u32 %s1, 4
      %s27 = int_to_ptr.hbm [resolvable:$true] %s26
      %s28 = sshll.u32 [#allocation5], 4
      %s29 = int_to_ptr.vmem [resolvable:$true] %s28
      %34 = dma.hbm_to_vmem [thread:$0]  %s27, 32768, %s29, [#allocation6], 128, 128, 8
    $region9: #{tpu_custom_call.1} parent=1 // pred_fallthru
      _
    // Predicated region
    $region10: #{tpu_custom_call.1} parent=1 // pred_check
      _
    $region11: #{tpu_custom_call.1} parent=1 // pred_check_branch
      %36 = sbr.rel (0) target = $region13
    $region12: #{tpu_custom_call.1} parent=1 // pred_region
      _
    $region13: #{tpu_custom_call.1} parent=1 // pred_fallthru
      _
    // Predicated region
    $region14: #{tpu_custom_call.1} parent=1 // pred_check
      _
    $region15: #{tpu_custom_call.1} parent=1 // pred_check_branch
      %38 = sbr.rel (0) target = $region17
    $region16: #{tpu_custom_call.1} parent=1 // pred_region
      %40 = dma.done [#allocation3], 2048
    $region17: #{tpu_custom_call.1} parent=1 // pred_fallthru
      _
    // Predicated region
    $region18: #{tpu_custom_call.1} parent=1 // pred_check
      _
    $region19: #{tpu_custom_call.1} parent=1 // pred_check_branch
      %42 = sbr.rel (0) target = $region21
    $region20: #{tpu_custom_call.1} parent=1 // pred_region
      %44 = dma.done [#allocation6], 32768
    $region21: #{tpu_custom_call.1} parent=1 // pred_fallthru
      _
    %v45 = vld [vmem:[#allocation2] sm:$0xff]
    %v46 = vld [vmem:[#allocation2 + $0x8] sm:$0xff]
    %v47 = vld [vmem:[#allocation2 + $0x10] sm:$0xff]
    %v48 = vld [vmem:[#allocation2 + $0x18] sm:$0xff]
    %v49 = vld [vmem:[#allocation2 + $0x20] sm:$0xff]
    %v50 = vld [vmem:[#allocation2 + $0x28] sm:$0xff]
    %v51 = vld [vmem:[#allocation2 + $0x30] sm:$0xff]
    %v52 = vld [vmem:[#allocation2 + $0x38] sm:$0xff]
    %v53 = vld [vmem:[#allocation2 + $0x40] sm:$0xff]
    %v54 = vld [vmem:[#allocation2 + $0x48] sm:$0xff]
    %v55 = vld [vmem:[#allocation2 + $0x50] sm:$0xff]
    %v56 = vld [vmem:[#allocation2 + $0x58] sm:$0xff]
    %v57 = vld [vmem:[#allocation2 + $0x60] sm:$0xff]
    %v58 = vld [vmem:[#allocation2 + $0x68] sm:$0xff]
    %v59 = vld [vmem:[#allocation2 + $0x70] sm:$0xff]
    %v60 = vld [vmem:[#allocation2 + $0x78] sm:$0xff]
    %v61 = vmax.f32 %v45, 0.0
    %v62 = vmax.f32 %v46, 0.0
    %v63 = vmax.f32 %v47, 0.0
    %v64 = vmax.f32 %v48, 0.0
    %v65 = vmax.f32 %v49, 0.0
    %v66 = vmax.f32 %v50, 0.0
    %v67 = vmax.f32 %v51, 0.0
    %v68 = vmax.f32 %v52, 0.0
    %v69 = vmax.f32 %v53, 0.0
    %v70 = vmax.f32 %v54, 0.0
    %v71 = vmax.f32 %v55, 0.0
    %v72 = vmax.f32 %v56, 0.0
    %v73 = vmax.f32 %v57, 0.0
    %v74 = vmax.f32 %v58, 0.0
    %v75 = vmax.f32 %v59, 0.0
    %v76 = vmax.f32 %v60, 0.0
    %v77 = vld [vmem:[#allocation5] sm:$0xff]
    %v78 = vld [vmem:[#allocation5 + $0x8] sm:$0xff]
    %v79 = vld [vmem:[#allocation5 + $0x10] sm:$0xff]
    %v80 = vld [vmem:[#allocation5 + $0x18] sm:$0xff]
    %v81 = vld [vmem:[#allocation5 + $0x20] sm:$0xff]
    %v82 = vld [vmem:[#allocation5 + $0x28] sm:$0xff]
    %v83 = vld [vmem:[#allocation5 + $0x30] sm:$0xff]
    %v84 = vld [vmem:[#allocation5 + $0x38] sm:$0xff]
    %v85 = vld [vmem:[#allocation5 + $0x40] sm:$0xff]
    %v86 = vld [vmem:[#allocation5 + $0x48] sm:$0xff]
    %v87 = vld [vmem:[#allocation5 + $0x50] sm:$0xff]
    %v88 = vld [vmem:[#allocation5 + $0x58] sm:$0xff]
    %v89 = vld [vmem:[#allocation5 + $0x60] sm:$0xff]
    %v90 = vld [vmem:[#allocation5 + $0x68] sm:$0xff]
    %v91 = vld [vmem:[#allocation5 + $0x70] sm:$0xff]
    %v92 = vld [vmem:[#allocation5 + $0x78] sm:$0xff]
    %v93 = vld [vmem:[#allocation5 + $0x80] sm:$0xff]
    %v94 = vld [vmem:[#allocation5 + $0x88] sm:$0xff]
    %v95 = vld [vmem:[#allocation5 + $0x90] sm:$0xff]
    %v96 = vld [vmem:[#allocation5 + $0x98] sm:$0xff]
    %v97 = vld [vmem:[#allocation5 + $0xa0] sm:$0xff]
    %v98 = vld [vmem:[#allocation5 + $0xa8] sm:$0xff]
    %v99 = vld [vmem:[#allocation5 + $0xb0] sm:$0xff]
    %v100 = vld [vmem:[#allocation5 + $0xb8] sm:$0xff]
    %v101 = vld [vmem:[#allocation5 + $0xc0] sm:$0xff]
    %v102 = vld [vmem:[#allocation5 + $0xc8] sm:$0xff]
    %v103 = vld [vmem:[#allocation5 + $0xd0] sm:$0xff]
    %v104 = vld [vmem:[#allocation5 + $0xd8] sm:$0xff]
    %v105 = vld [vmem:[#allocation5 + $0xe0] sm:$0xff]
    %v106 = vld [vmem:[#allocation5 + $0xe8] sm:$0xff]
    %v107 = vld [vmem:[#allocation5 + $0xf0] sm:$0xff]
    %v108 = vld [vmem:[#allocation5 + $0xf8] sm:$0xff]
    %v109 = vld [vmem:[#allocation5 + $0x100] sm:$0xff]
    %v110 = vld [vmem:[#allocation5 + $0x108] sm:$0xff]
    %v111 = vld [vmem:[#allocation5 + $0x110] sm:$0xff]
    %v112 = vld [vmem:[#allocation5 + $0x118] sm:$0xff]
    %v113 = vld [vmem:[#allocation5 + $0x120] sm:$0xff]
    %v114 = vld [vmem:[#allocation5 + $0x128] sm:$0xff]
    %v115 = vld [vmem:[#allocation5 + $0x130] sm:$0xff]
    %v116 = vld [vmem:[#allocation5 + $0x138] sm:$0xff]
    %v117 = vld [vmem:[#allocation5 + $0x140] sm:$0xff]
    %v118 = vld [vmem:[#allocation5 + $0x148] sm:$0xff]
    %v119 = vld [vmem:[#allocation5 + $0x150] sm:$0xff]
    %v120 = vld [vmem:[#allocation5 + $0x158] sm:$0xff]
    %v121 = vld [vmem:[#allocation5 + $0x160] sm:$0xff]
    %v122 = vld [vmem:[#allocation5 + $0x168] sm:$0xff]
    %v123 = vld [vmem:[#allocation5 + $0x170] sm:$0xff]
    %v124 = vld [vmem:[#allocation5 + $0x178] sm:$0xff]
    %v125 = vld [vmem:[#allocation5 + $0x180] sm:$0xff]
    %v126 = vld [vmem:[#allocation5 + $0x188] sm:$0xff]
    %v127 = vld [vmem:[#allocation5 + $0x190] sm:$0xff]
    %v128 = vld [vmem:[#allocation5 + $0x198] sm:$0xff]
    %v129 = vld [vmem:[#allocation5 + $0x1a0] sm:$0xff]
    %v130 = vld [vmem:[#allocation5 + $0x1a8] sm:$0xff]
    %v131 = vld [vmem:[#allocation5 + $0x1b0] sm:$0xff]
    %v132 = vld [vmem:[#allocation5 + $0x1b8] sm:$0xff]
    %v133 = vld [vmem:[#allocation5 + $0x1c0] sm:$0xff]
    %v134 = vld [vmem:[#allocation5 + $0x1c8] sm:$0xff]
    %v135 = vld [vmem:[#allocation5 + $0x1d0] sm:$0xff]
    %v136 = vld [vmem:[#allocation5 + $0x1d8] sm:$0xff]
    %v137 = vld [vmem:[#allocation5 + $0x1e0] sm:$0xff]
    %v138 = vld [vmem:[#allocation5 + $0x1e8] sm:$0xff]
    %v139 = vld [vmem:[#allocation5 + $0x1f0] sm:$0xff]
    %v140 = vld [vmem:[#allocation5 + $0x1f8] sm:$0xff]
    %v141 = vld [vmem:[#allocation5 + $0x200] sm:$0xff]
    %v142 = vld [vmem:[#allocation5 + $0x208] sm:$0xff]
    %v143 = vld [vmem:[#allocation5 + $0x210] sm:$0xff]
    %v144 = vld [vmem:[#allocation5 + $0x218] sm:$0xff]
    %v145 = vld [vmem:[#allocation5 + $0x220] sm:$0xff]
    %v146 = vld [vmem:[#allocation5 + $0x228] sm:$0xff]
    %v147 = vld [vmem:[#allocation5 + $0x230] sm:$0xff]
    %v148 = vld [vmem:[#allocation5 + $0x238] sm:$0xff]
    %v149 = vld [vmem:[#allocation5 + $0x240] sm:$0xff]
    %v150 = vld [vmem:[#allocation5 + $0x248] sm:$0xff]
    %v151 = vld [vmem:[#allocation5 + $0x250] sm:$0xff]
    %v152 = vld [vmem:[#allocation5 + $0x258] sm:$0xff]
    %v153 = vld [vmem:[#allocation5 + $0x260] sm:$0xff]
    %v154 = vld [vmem:[#allocation5 + $0x268] sm:$0xff]
    %v155 = vld [vmem:[#allocation5 + $0x270] sm:$0xff]
    %v156 = vld [vmem:[#allocation5 + $0x278] sm:$0xff]
    %v157 = vld [vmem:[#allocation5 + $0x280] sm:$0xff]
    %v158 = vld [vmem:[#allocation5 + $0x288] sm:$0xff]
    %v159 = vld [vmem:[#allocation5 + $0x290] sm:$0xff]
    %v160 = vld [vmem:[#allocation5 + $0x298] sm:$0xff]
    %v161 = vld [vmem:[#allocation5 + $0x2a0] sm:$0xff]
    %v162 = vld [vmem:[#allocation5 + $0x2a8] sm:$0xff]
    %v163 = vld [vmem:[#allocation5 + $0x2b0] sm:$0xff]
    %v164 = vld [vmem:[#allocation5 + $0x2b8] sm:$0xff]
    %v165 = vld [vmem:[#allocation5 + $0x2c0] sm:$0xff]
    %v166 = vld [vmem:[#allocation5 + $0x2c8] sm:$0xff]
    %v167 = vld [vmem:[#allocation5 + $0x2d0] sm:$0xff]
    %v168 = vld [vmem:[#allocation5 + $0x2d8] sm:$0xff]
    %v169 = vld [vmem:[#allocation5 + $0x2e0] sm:$0xff]
    %v170 = vld [vmem:[#allocation5 + $0x2e8] sm:$0xff]
    %v171 = vld [vmem:[#allocation5 + $0x2f0] sm:$0xff]
    %v172 = vld [vmem:[#allocation5 + $0x2f8] sm:$0xff]
    %v173 = vld [vmem:[#allocation5 + $0x300] sm:$0xff]
    %v174 = vld [vmem:[#allocation5 + $0x308] sm:$0xff]
    %v175 = vld [vmem:[#allocation5 + $0x310] sm:$0xff]
    %v176 = vld [vmem:[#allocation5 + $0x318] sm:$0xff]
    %v177 = vld [vmem:[#allocation5 + $0x320] sm:$0xff]
    %v178 = vld [vmem:[#allocation5 + $0x328] sm:$0xff]
    %v179 = vld [vmem:[#allocation5 + $0x330] sm:$0xff]
    %v180 = vld [vmem:[#allocation5 + $0x338] sm:$0xff]
    %v181 = vld [vmem:[#allocation5 + $0x340] sm:$0xff]
    %v182 = vld [vmem:[#allocation5 + $0x348] sm:$0xff]
    %v183 = vld [vmem:[#allocation5 + $0x350] sm:$0xff]
    %v184 = vld [vmem:[#allocation5 + $0x358] sm:$0xff]
    %v185 = vld [vmem:[#allocation5 + $0x360] sm:$0xff]
    %v186 = vld [vmem:[#allocation5 + $0x368] sm:$0xff]
    %v187 = vld [vmem:[#allocation5 + $0x370] sm:$0xff]
    %v188 = vld [vmem:[#allocation5 + $0x378] sm:$0xff]
    %v189 = vld [vmem:[#allocation5 + $0x380] sm:$0xff]
    %v190 = vld [vmem:[#allocation5 + $0x388] sm:$0xff]
    %v191 = vld [vmem:[#allocation5 + $0x390] sm:$0xff]
    %v192 = vld [vmem:[#allocation5 + $0x398] sm:$0xff]
    %v193 = vld [vmem:[#allocation5 + $0x3a0] sm:$0xff]
    %v194 = vld [vmem:[#allocation5 + $0x3a8] sm:$0xff]
    %v195 = vld [vmem:[#allocation5 + $0x3b0] sm:$0xff]
    %v196 = vld [vmem:[#allocation5 + $0x3b8] sm:$0xff]
    %v197 = vld [vmem:[#allocation5 + $0x3c0] sm:$0xff]
    %v198 = vld [vmem:[#allocation5 + $0x3c8] sm:$0xff]
    %v199 = vld [vmem:[#allocation5 + $0x3d0] sm:$0xff]
    %v200 = vld [vmem:[#allocation5 + $0x3d8] sm:$0xff]
    %v201 = vld [vmem:[#allocation5 + $0x3e0] sm:$0xff]
    %v202 = vld [vmem:[#allocation5 + $0x3e8] sm:$0xff]
    %v203 = vld [vmem:[#allocation5 + $0x3f0] sm:$0xff]
    %v204 = vld [vmem:[#allocation5 + $0x3f8] sm:$0xff]
    %v205 = vld [vmem:[#allocation5 + $0x400] sm:$0xff]
    %v206 = vld [vmem:[#allocation5 + $0x408] sm:$0xff]
    %v207 = vld [vmem:[#allocation5 + $0x410] sm:$0xff]
    %v208 = vld [vmem:[#allocation5 + $0x418] sm:$0xff]
    %v209 = vld [vmem:[#allocation5 + $0x420] sm:$0xff]
    %v210 = vld [vmem:[#allocation5 + $0x428] sm:$0xff]
    %v211 = vld [vmem:[#allocation5 + $0x430] sm:$0xff]
    %v212 = vld [vmem:[#allocation5 + $0x438] sm:$0xff]
    %v213 = vld [vmem:[#allocation5 + $0x440] sm:$0xff]
    %v214 = vld [vmem:[#allocation5 + $0x448] sm:$0xff]
    %v215 = vld [vmem:[#allocation5 + $0x450] sm:$0xff]
    %v216 = vld [vmem:[#allocation5 + $0x458] sm:$0xff]
    %v217 = vld [vmem:[#allocation5 + $0x460] sm:$0xff]
    %v218 = vld [vmem:[#allocation5 + $0x468] sm:$0xff]
    %v219 = vld [vmem:[#allocation5 + $0x470] sm:$0xff]
    %v220 = vld [vmem:[#allocation5 + $0x478] sm:$0xff]
    %v221 = vld [vmem:[#allocation5 + $0x480] sm:$0xff]
    %v222 = vld [vmem:[#allocation5 + $0x488] sm:$0xff]
    %v223 = vld [vmem:[#allocation5 + $0x490] sm:$0xff]
    %v224 = vld [vmem:[#allocation5 + $0x498] sm:$0xff]
    %v225 = vld [vmem:[#allocation5 + $0x4a0] sm:$0xff]
    %v226 = vld [vmem:[#allocation5 + $0x4a8] sm:$0xff]
    %v227 = vld [vmem:[#allocation5 + $0x4b0] sm:$0xff]
    %v228 = vld [vmem:[#allocation5 + $0x4b8] sm:$0xff]
    %v229 = vld [vmem:[#allocation5 + $0x4c0] sm:$0xff]
    %v230 = vld [vmem:[#allocation5 + $0x4c8] sm:$0xff]
    %v231 = vld [vmem:[#allocation5 + $0x4d0] sm:$0xff]
    %v232 = vld [vmem:[#allocation5 + $0x4d8] sm:$0xff]
    %v233 = vld [vmem:[#allocation5 + $0x4e0] sm:$0xff]
    %v234 = vld [vmem:[#allocation5 + $0x4e8] sm:$0xff]
    %v235 = vld [vmem:[#allocation5 + $0x4f0] sm:$0xff]
    %v236 = vld [vmem:[#allocation5 + $0x4f8] sm:$0xff]
    %v237 = vld [vmem:[#allocation5 + $0x500] sm:$0xff]
    %v238 = vld [vmem:[#allocation5 + $0x508] sm:$0xff]
    %v239 = vld [vmem:[#allocation5 + $0x510] sm:$0xff]
    %v240 = vld [vmem:[#allocation5 + $0x518] sm:$0xff]
    %v241 = vld [vmem:[#allocation5 + $0x520] sm:$0xff]
    %v242 = vld [vmem:[#allocation5 + $0x528] sm:$0xff]
    %v243 = vld [vmem:[#allocation5 + $0x530] sm:$0xff]
    %v244 = vld [vmem:[#allocation5 + $0x538] sm:$0xff]
    %v245 = vld [vmem:[#allocation5 + $0x540] sm:$0xff]
    %v246 = vld [vmem:[#allocation5 + $0x548] sm:$0xff]
    %v247 = vld [vmem:[#allocation5 + $0x550] sm:$0xff]
    %v248 = vld [vmem:[#allocation5 + $0x558] sm:$0xff]
    %v249 = vld [vmem:[#allocation5 + $0x560] sm:$0xff]
    %v250 = vld [vmem:[#allocation5 + $0x568] sm:$0xff]
    %v251 = vld [vmem:[#allocation5 + $0x570] sm:$0xff]
    %v252 = vld [vmem:[#allocation5 + $0x578] sm:$0xff]
    %v253 = vld [vmem:[#allocation5 + $0x580] sm:$0xff]
    %v254 = vld [vmem:[#allocation5 + $0x588] sm:$0xff]
    %v255 = vld [vmem:[#allocation5 + $0x590] sm:$0xff]
    %v256 = vld [vmem:[#allocation5 + $0x598] sm:$0xff]
    %v257 = vld [vmem:[#allocation5 + $0x5a0] sm:$0xff]
    %v258 = vld [vmem:[#allocation5 + $0x5a8] sm:$0xff]
    %v259 = vld [vmem:[#allocation5 + $0x5b0] sm:$0xff]
    %v260 = vld [vmem:[#allocation5 + $0x5b8] sm:$0xff]
    %v261 = vld [vmem:[#allocation5 + $0x5c0] sm:$0xff]
    %v262 = vld [vmem:[#allocation5 + $0x5c8] sm:$0xff]
    %v263 = vld [vmem:[#allocation5 + $0x5d0] sm:$0xff]
    %v264 = vld [vmem:[#allocation5 + $0x5d8] sm:$0xff]
    %v265 = vld [vmem:[#allocation5 + $0x5e0] sm:$0xff]
    %v266 = vld [vmem:[#allocation5 + $0x5e8] sm:$0xff]
    %v267 = vld [vmem:[#allocation5 + $0x5f0] sm:$0xff]
    %v268 = vld [vmem:[#allocation5 + $0x5f8] sm:$0xff]
    %v269 = vld [vmem:[#allocation5 + $0x600] sm:$0xff]
    %v270 = vld [vmem:[#allocation5 + $0x608] sm:$0xff]
    %v271 = vld [vmem:[#allocation5 + $0x610] sm:$0xff]
    %v272 = vld [vmem:[#allocation5 + $0x618] sm:$0xff]
    %v273 = vld [vmem:[#allocation5 + $0x620] sm:$0xff]
    %v274 = vld [vmem:[#allocation5 + $0x628] sm:$0xff]
    %v275 = vld [vmem:[#allocation5 + $0x630] sm:$0xff]
    %v276 = vld [vmem:[#allocation5 + $0x638] sm:$0xff]
    %v277 = vld [vmem:[#allocation5 + $0x640] sm:$0xff]
    %v278 = vld [vmem:[#allocation5 + $0x648] sm:$0xff]
    %v279 = vld [vmem:[#allocation5 + $0x650] sm:$0xff]
    %v280 = vld [vmem:[#allocation5 + $0x658] sm:$0xff]
    %v281 = vld [vmem:[#allocation5 + $0x660] sm:$0xff]
    %v282 = vld [vmem:[#allocation5 + $0x668] sm:$0xff]
    %v283 = vld [vmem:[#allocation5 + $0x670] sm:$0xff]
    %v284 = vld [vmem:[#allocation5 + $0x678] sm:$0xff]
    %v285 = vld [vmem:[#allocation5 + $0x680] sm:$0xff]
    %v286 = vld [vmem:[#allocation5 + $0x688] sm:$0xff]
    %v287 = vld [vmem:[#allocation5 + $0x690] sm:$0xff]
    %v288 = vld [vmem:[#allocation5 + $0x698] sm:$0xff]
    %v289 = vld [vmem:[#allocation5 + $0x6a0] sm:$0xff]
    %v290 = vld [vmem:[#allocation5 + $0x6a8] sm:$0xff]
    %v291 = vld [vmem:[#allocation5 + $0x6b0] sm:$0xff]
    %v292 = vld [vmem:[#allocation5 + $0x6b8] sm:$0xff]
    %v293 = vld [vmem:[#allocation5 + $0x6c0] sm:$0xff]
    %v294 = vld [vmem:[#allocation5 + $0x6c8] sm:$0xff]
    %v295 = vld [vmem:[#allocation5 + $0x6d0] sm:$0xff]
    %v296 = vld [vmem:[#allocation5 + $0x6d8] sm:$0xff]
    %v297 = vld [vmem:[#allocation5 + $0x6e0] sm:$0xff]
    %v298 = vld [vmem:[#allocation5 + $0x6e8] sm:$0xff]
    %v299 = vld [vmem:[#allocation5 + $0x6f0] sm:$0xff]
    %v300 = vld [vmem:[#allocation5 + $0x6f8] sm:$0xff]
    %v301 = vld [vmem:[#allocation5 + $0x700] sm:$0xff]
    %v302 = vld [vmem:[#allocation5 + $0x708] sm:$0xff]
    %v303 = vld [vmem:[#allocation5 + $0x710] sm:$0xff]
    %v304 = vld [vmem:[#allocation5 + $0x718] sm:$0xff]
    %v305 = vld [vmem:[#allocation5 + $0x720] sm:$0xff]
    %v306 = vld [vmem:[#allocation5 + $0x728] sm:$0xff]
    %v307 = vld [vmem:[#allocation5 + $0x730] sm:$0xff]
    %v308 = vld [vmem:[#allocation5 + $0x738] sm:$0xff]
    %v309 = vld [vmem:[#allocation5 + $0x740] sm:$0xff]
    %v310 = vld [vmem:[#allocation5 + $0x748] sm:$0xff]
    %v311 = vld [vmem:[#allocation5 + $0x750] sm:$0xff]
    %v312 = vld [vmem:[#allocation5 + $0x758] sm:$0xff]
    %v313 = vld [vmem:[#allocation5 + $0x760] sm:$0xff]
    %v314 = vld [vmem:[#allocation5 + $0x768] sm:$0xff]
    %v315 = vld [vmem:[#allocation5 + $0x770] sm:$0xff]
    %v316 = vld [vmem:[#allocation5 + $0x778] sm:$0xff]
    %v317 = vld [vmem:[#allocation5 + $0x780] sm:$0xff]
    %v318 = vld [vmem:[#allocation5 + $0x788] sm:$0xff]
    %v319 = vld [vmem:[#allocation5 + $0x790] sm:$0xff]
    %v320 = vld [vmem:[#allocation5 + $0x798] sm:$0xff]
    %v321 = vld [vmem:[#allocation5 + $0x7a0] sm:$0xff]
    %v322 = vld [vmem:[#allocation5 + $0x7a8] sm:$0xff]
    %v323 = vld [vmem:[#allocation5 + $0x7b0] sm:$0xff]
    %v324 = vld [vmem:[#allocation5 + $0x7b8] sm:$0xff]
    %v325 = vld [vmem:[#allocation5 + $0x7c0] sm:$0xff]
    %v326 = vld [vmem:[#allocation5 + $0x7c8] sm:$0xff]
    %v327 = vld [vmem:[#allocation5 + $0x7d0] sm:$0xff]
    %v328 = vld [vmem:[#allocation5 + $0x7d8] sm:$0xff]
    %v329 = vld [vmem:[#allocation5 + $0x7e0] sm:$0xff]
    %v330 = vld [vmem:[#allocation5 + $0x7e8] sm:$0xff]
    %v331 = vld [vmem:[#allocation5 + $0x7f0] sm:$0xff]
    %v332 = vld [vmem:[#allocation5 + $0x7f8] sm:$0xff]
    %v333 = vld [vmem:[%s2] sm:$0x1]
    %v335 = vperm.slane %v333, 0
    %337 = vmatpush.msra.mxu0 %v92
    %338 = vmatpush.msra.mxu0 %v91
    %339 = vmatpush.msra.mxu0 %v90
    %340 = vmatpush.msra.mxu0 %v89
    %341 = vmatpush.msra.mxu0 %v88
    %342 = vmatpush.msra.mxu0 %v87
    %343 = vmatpush.msra.mxu0 %v86
    %344 = vmatpush.msra.mxu0 %v85
    %345 = vmatpush.msra.mxu0 %v84
    %346 = vmatpush.msra.mxu0 %v83
    %347 = vmatpush.msra.mxu0 %v82
    %348 = vmatpush.msra.mxu0 %v81
    %349 = vmatpush.msra.mxu0 %v80
    %350 = vmatpush.msra.mxu0 %v79
    %351 = vmatpush.msra.mxu0 %v78
    %352 = vmatpush.msra.mxu0 %v77
    %353 = vmatmul.f32.gmra.mxu0 %v61
    %v354 = vpop.f32.mrf.mxu0
    %v355 = vadd.f32 %v335, %v354
    %356 = vdwg.mxu0
    %357 = vmatpush.msra.mxu0 %v108
    %358 = vmatpush.msra.mxu0 %v107
    %359 = vmatpush.msra.mxu0 %v106
    %360 = vmatpush.msra.mxu0 %v105
    %361 = vmatpush.msra.mxu0 %v104
    %362 = vmatpush.msra.mxu0 %v103
    %363 = vmatpush.msra.mxu0 %v102
    %364 = vmatpush.msra.mxu0 %v101
    %365 = vmatpush.msra.mxu0 %v100
    %366 = vmatpush.msra.mxu0 %v99
    %367 = vmatpush.msra.mxu0 %v98
    %368 = vmatpush.msra.mxu0 %v97
    %369 = vmatpush.msra.mxu0 %v96
    %370 = vmatpush.msra.mxu0 %v95
    %371 = vmatpush.msra.mxu0 %v94
    %372 = vmatpush.msra.mxu0 %v93
    %373 = vmatmul.f32.gmra.mxu0 %v62
    %v374 = vpop.f32.mrf.mxu0
    %v375 = vadd.f32 %v355, %v374
    %376 = vdwg.mxu0
    %377 = vmatpush.msra.mxu0 %v124
    %378 = vmatpush.msra.mxu0 %v123
    %379 = vmatpush.msra.mxu0 %v122
    %380 = vmatpush.msra.mxu0 %v121
    %381 = vmatpush.msra.mxu0 %v120
    %382 = vmatpush.msra.mxu0 %v119
    %383 = vmatpush.msra.mxu0 %v118
    %384 = vmatpush.msra.mxu0 %v117
    %385 = vmatpush.msra.mxu0 %v116
    %386 = vmatpush.msra.mxu0 %v115
    %387 = vmatpush.msra.mxu0 %v114
    %388 = vmatpush.msra.mxu0 %v113
    %389 = vmatpush.msra.mxu0 %v112
    %390 = vmatpush.msra.mxu0 %v111
    %391 = vmatpush.msra.mxu0 %v110
    %392 = vmatpush.msra.mxu0 %v109
    %393 = vmatmul.f32.gmra.mxu0 %v63
    %v394 = vpop.f32.mrf.mxu0
    %v395 = vadd.f32 %v375, %v394
    %396 = vdwg.mxu0
    %397 = vmatpush.msra.mxu0 %v140
    %398 = vmatpush.msra.mxu0 %v139
    %399 = vmatpush.msra.mxu0 %v138
    %400 = vmatpush.msra.mxu0 %v137
    %401 = vmatpush.msra.mxu0 %v136
    %402 = vmatpush.msra.mxu0 %v135
    %403 = vmatpush.msra.mxu0 %v134
    %404 = vmatpush.msra.mxu0 %v133
    %405 = vmatpush.msra.mxu0 %v132
    %406 = vmatpush.msra.mxu0 %v131
    %407 = vmatpush.msra.mxu0 %v130
    %408 = vmatpush.msra.mxu0 %v129
    %409 = vmatpush.msra.mxu0 %v128
    %410 = vmatpush.msra.mxu0 %v127
    %411 = vmatpush.msra.mxu0 %v126
    %412 = vmatpush.msra.mxu0 %v125
    %413 = vmatmul.f32.gmra.mxu0 %v64
    %v414 = vpop.f32.mrf.mxu0
    %v415 = vadd.f32 %v395, %v414
    %416 = vdwg.mxu0
    %417 = vmatpush.msra.mxu0 %v156
    %418 = vmatpush.msra.mxu0 %v155
    %419 = vmatpush.msra.mxu0 %v154
    %420 = vmatpush.msra.mxu0 %v153
    %421 = vmatpush.msra.mxu0 %v152
    %422 = vmatpush.msra.mxu0 %v151
    %423 = vmatpush.msra.mxu0 %v150
    %424 = vmatpush.msra.mxu0 %v149
    %425 = vmatpush.msra.mxu0 %v148
    %426 = vmatpush.msra.mxu0 %v147
    %427 = vmatpush.msra.mxu0 %v146
    %428 = vmatpush.msra.mxu0 %v145
    %429 = vmatpush.msra.mxu0 %v144
    %430 = vmatpush.msra.mxu0 %v143
    %431 = vmatpush.msra.mxu0 %v142
    %432 = vmatpush.msra.mxu0 %v141
    %433 = vmatmul.f32.gmra.mxu0 %v65
    %v434 = vpop.f32.mrf.mxu0
    %v435 = vadd.f32 %v415, %v434
    %436 = vdwg.mxu0
    %437 = vmatpush.msra.mxu0 %v172
    %438 = vmatpush.msra.mxu0 %v171
    %439 = vmatpush.msra.mxu0 %v170
    %440 = vmatpush.msra.mxu0 %v169
    %441 = vmatpush.msra.mxu0 %v168
    %442 = vmatpush.msra.mxu0 %v167
    %443 = vmatpush.msra.mxu0 %v166
    %444 = vmatpush.msra.mxu0 %v165
    %445 = vmatpush.msra.mxu0 %v164
    %446 = vmatpush.msra.mxu0 %v163
    %447 = vmatpush.msra.mxu0 %v162
    %448 = vmatpush.msra.mxu0 %v161
    %449 = vmatpush.msra.mxu0 %v160
    %450 = vmatpush.msra.mxu0 %v159
    %451 = vmatpush.msra.mxu0 %v158
    %452 = vmatpush.msra.mxu0 %v157
    %453 = vmatmul.f32.gmra.mxu0 %v66
    %v454 = vpop.f32.mrf.mxu0
    %v455 = vadd.f32 %v435, %v454
    %456 = vdwg.mxu0
    %457 = vmatpush.msra.mxu0 %v188
    %458 = vmatpush.msra.mxu0 %v187
    %459 = vmatpush.msra.mxu0 %v186
    %460 = vmatpush.msra.mxu0 %v185
    %461 = vmatpush.msra.mxu0 %v184
    %462 = vmatpush.msra.mxu0 %v183
    %463 = vmatpush.msra.mxu0 %v182
    %464 = vmatpush.msra.mxu0 %v181
    %465 = vmatpush.msra.mxu0 %v180
    %466 = vmatpush.msra.mxu0 %v179
    %467 = vmatpush.msra.mxu0 %v178
    %468 = vmatpush.msra.mxu0 %v177
    %469 = vmatpush.msra.mxu0 %v176
    %470 = vmatpush.msra.mxu0 %v175
    %471 = vmatpush.msra.mxu0 %v174
    %472 = vmatpush.msra.mxu0 %v173
    %473 = vmatmul.f32.gmra.mxu0 %v67
    %v474 = vpop.f32.mrf.mxu0
    %v475 = vadd.f32 %v455, %v474
    %476 = vdwg.mxu0
    %477 = vmatpush.msra.mxu0 %v204
    %478 = vmatpush.msra.mxu0 %v203
    %479 = vmatpush.msra.mxu0 %v202
    %480 = vmatpush.msra.mxu0 %v201
    %481 = vmatpush.msra.mxu0 %v200
    %482 = vmatpush.msra.mxu0 %v199
    %483 = vmatpush.msra.mxu0 %v198
    %484 = vmatpush.msra.mxu0 %v197
    %485 = vmatpush.msra.mxu0 %v196
    %486 = vmatpush.msra.mxu0 %v195
    %487 = vmatpush.msra.mxu0 %v194
    %488 = vmatpush.msra.mxu0 %v193
    %489 = vmatpush.msra.mxu0 %v192
    %490 = vmatpush.msra.mxu0 %v191
    %491 = vmatpush.msra.mxu0 %v190
    %492 = vmatpush.msra.mxu0 %v189
    %493 = vmatmul.f32.gmra.mxu0 %v68
    %v494 = vpop.f32.mrf.mxu0
    %v495 = vadd.f32 %v475, %v494
    %496 = vdwg.mxu0
    %497 = vmatpush.msra.mxu0 %v220
    %498 = vmatpush.msra.mxu0 %v219
    %499 = vmatpush.msra.mxu0 %v218
    %500 = vmatpush.msra.mxu0 %v217
    %501 = vmatpush.msra.mxu0 %v216
    %502 = vmatpush.msra.mxu0 %v215
    %503 = vmatpush.msra.mxu0 %v214
    %504 = vmatpush.msra.mxu0 %v213
    %505 = vmatpush.msra.mxu0 %v212
    %506 = vmatpush.msra.mxu0 %v211
    %507 = vmatpush.msra.mxu0 %v210
    %508 = vmatpush.msra.mxu0 %v209
    %509 = vmatpush.msra.mxu0 %v208
    %510 = vmatpush.msra.mxu0 %v207
    %511 = vmatpush.msra.mxu0 %v206
    %512 = vmatpush.msra.mxu0 %v205
    %513 = vmatmul.f32.gmra.mxu0 %v69
    %v514 = vpop.f32.mrf.mxu0
    %v515 = vadd.f32 %v495, %v514
    %516 = vdwg.mxu0
    %517 = vmatpush.msra.mxu0 %v236
    %518 = vmatpush.msra.mxu0 %v235
    %519 = vmatpush.msra.mxu0 %v234
    %520 = vmatpush.msra.mxu0 %v233
    %521 = vmatpush.msra.mxu0 %v232
    %522 = vmatpush.msra.mxu0 %v231
    %523 = vmatpush.msra.mxu0 %v230
    %524 = vmatpush.msra.mxu0 %v229
    %525 = vmatpush.msra.mxu0 %v228
    %526 = vmatpush.msra.mxu0 %v227
    %527 = vmatpush.msra.mxu0 %v226
    %528 = vmatpush.msra.mxu0 %v225
    %529 = vmatpush.msra.mxu0 %v224
    %530 = vmatpush.msra.mxu0 %v223
    %531 = vmatpush.msra.mxu0 %v222
    %532 = vmatpush.msra.mxu0 %v221
    %533 = vmatmul.f32.gmra.mxu0 %v70
    %v534 = vpop.f32.mrf.mxu0
    %v535 = vadd.f32 %v515, %v534
    %536 = vdwg.mxu0
    %537 = vmatpush.msra.mxu0 %v252
    %538 = vmatpush.msra.mxu0 %v251
    %539 = vmatpush.msra.mxu0 %v250
    %540 = vmatpush.msra.mxu0 %v249
    %541 = vmatpush.msra.mxu0 %v248
    %542 = vmatpush.msra.mxu0 %v247
    %543 = vmatpush.msra.mxu0 %v246
    %544 = vmatpush.msra.mxu0 %v245
    %545 = vmatpush.msra.mxu0 %v244
    %546 = vmatpush.msra.mxu0 %v243
    %547 = vmatpush.msra.mxu0 %v242
    %548 = vmatpush.msra.mxu0 %v241
    %549 = vmatpush.msra.mxu0 %v240
    %550 = vmatpush.msra.mxu0 %v239
    %551 = vmatpush.msra.mxu0 %v238
    %552 = vmatpush.msra.mxu0 %v237
    %553 = vmatmul.f32.gmra.mxu0 %v71
    %v554 = vpop.f32.mrf.mxu0
    %v555 = vadd.f32 %v535, %v554
    %556 = vdwg.mxu0
    %557 = vmatpush.msra.mxu0 %v268
    %558 = vmatpush.msra.mxu0 %v267
    %559 = vmatpush.msra.mxu0 %v266
    %560 = vmatpush.msra.mxu0 %v265
    %561 = vmatpush.msra.mxu0 %v264
    %562 = vmatpush.msra.mxu0 %v263
    %563 = vmatpush.msra.mxu0 %v262
    %564 = vmatpush.msra.mxu0 %v261
    %565 = vmatpush.msra.mxu0 %v260
    %566 = vmatpush.msra.mxu0 %v259
    %567 = vmatpush.msra.mxu0 %v258
    %568 = vmatpush.msra.mxu0 %v257
    %569 = vmatpush.msra.mxu0 %v256
    %570 = vmatpush.msra.mxu0 %v255
    %571 = vmatpush.msra.mxu0 %v254
    %572 = vmatpush.msra.mxu0 %v253
    %573 = vmatmul.f32.gmra.mxu0 %v72
    %v574 = vpop.f32.mrf.mxu0
    %v575 = vadd.f32 %v555, %v574
    %576 = vdwg.mxu0
    %577 = vmatpush.msra.mxu0 %v284
    %578 = vmatpush.msra.mxu0 %v283
    %579 = vmatpush.msra.mxu0 %v282
    %580 = vmatpush.msra.mxu0 %v281
    %581 = vmatpush.msra.mxu0 %v280
    %582 = vmatpush.msra.mxu0 %v279
    %583 = vmatpush.msra.mxu0 %v278
    %584 = vmatpush.msra.mxu0 %v277
    %585 = vmatpush.msra.mxu0 %v276
    %586 = vmatpush.msra.mxu0 %v275
    %587 = vmatpush.msra.mxu0 %v274
    %588 = vmatpush.msra.mxu0 %v273
    %589 = vmatpush.msra.mxu0 %v272
    %590 = vmatpush.msra.mxu0 %v271
    %591 = vmatpush.msra.mxu0 %v270
    %592 = vmatpush.msra.mxu0 %v269
    %593 = vmatmul.f32.gmra.mxu0 %v73
    %v594 = vpop.f32.mrf.mxu0
    %v595 = vadd.f32 %v575, %v594
    %596 = vdwg.mxu0
    %597 = vmatpush.msra.mxu0 %v300
    %598 = vmatpush.msra.mxu0 %v299
    %599 = vmatpush.msra.mxu0 %v298
    %600 = vmatpush.msra.mxu0 %v297
    %601 = vmatpush.msra.mxu0 %v296
    %602 = vmatpush.msra.mxu0 %v295
    %603 = vmatpush.msra.mxu0 %v294
    %604 = vmatpush.msra.mxu0 %v293
    %605 = vmatpush.msra.mxu0 %v292
    %606 = vmatpush.msra.mxu0 %v291
    %607 = vmatpush.msra.mxu0 %v290
    %608 = vmatpush.msra.mxu0 %v289
    %609 = vmatpush.msra.mxu0 %v288
    %610 = vmatpush.msra.mxu0 %v287
    %611 = vmatpush.msra.mxu0 %v286
    %612 = vmatpush.msra.mxu0 %v285
    %613 = vmatmul.f32.gmra.mxu0 %v74
    %v614 = vpop.f32.mrf.mxu0
    %v615 = vadd.f32 %v595, %v614
    %616 = vdwg.mxu0
    %617 = vmatpush.msra.mxu0 %v316
    %618 = vmatpush.msra.mxu0 %v315
    %619 = vmatpush.msra.mxu0 %v314
    %620 = vmatpush.msra.mxu0 %v313
    %621 = vmatpush.msra.mxu0 %v312
    %622 = vmatpush.msra.mxu0 %v311
    %623 = vmatpush.msra.mxu0 %v310
    %624 = vmatpush.msra.mxu0 %v309
    %625 = vmatpush.msra.mxu0 %v308
    %626 = vmatpush.msra.mxu0 %v307
    %627 = vmatpush.msra.mxu0 %v306
    %628 = vmatpush.msra.mxu0 %v305
    %629 = vmatpush.msra.mxu0 %v304
    %630 = vmatpush.msra.mxu0 %v303
    %631 = vmatpush.msra.mxu0 %v302
    %632 = vmatpush.msra.mxu0 %v301
    %633 = vmatmul.f32.gmra.mxu0 %v75
    %v634 = vpop.f32.mrf.mxu0
    %v635 = vadd.f32 %v615, %v634
    %636 = vdwg.mxu0
    %637 = vmatpush.msra.mxu0 %v332
    %638 = vmatpush.msra.mxu0 %v331
    %639 = vmatpush.msra.mxu0 %v330
    %640 = vmatpush.msra.mxu0 %v329
    %641 = vmatpush.msra.mxu0 %v328
    %642 = vmatpush.msra.mxu0 %v327
    %643 = vmatpush.msra.mxu0 %v326
    %644 = vmatpush.msra.mxu0 %v325
    %645 = vmatpush.msra.mxu0 %v324
    %646 = vmatpush.msra.mxu0 %v323
    %647 = vmatpush.msra.mxu0 %v322
    %648 = vmatpush.msra.mxu0 %v321
    %649 = vmatpush.msra.mxu0 %v320
    %650 = vmatpush.msra.mxu0 %v319
    %651 = vmatpush.msra.mxu0 %v318
    %652 = vmatpush.msra.mxu0 %v317
    %653 = vmatmul.f32.gmra.mxu0 %v76
    %v654 = vpop.f32.mrf.mxu0
    %v655 = vadd.f32 %v635, %v654
    %656 = vdwg.mxu0
    %657 = vst [vmem:[#allocation7] sm:$0xff] %v655
    // Predicated region
    $region22: #{tpu_custom_call.1} parent=1 // pred_check
      _
    $region23: #{tpu_custom_call.1} parent=1 // pred_check_branch
      %659 = sbr.rel (0) target = $region25
    $region24: #{tpu_custom_call.1} parent=1 // pred_region
      %661 = vsyncadd [#allocation4], 0
      %s663 = sshll.u32 [#allocation7], 4
      %s664 = int_to_ptr.vmem [resolvable:$true] %s663
      %s665 = sshll.u32 %s3, 4
      %s666 = int_to_ptr.hbm [resolvable:$true] %s665
      %668 = dma.vmem_to_hbm [thread:$0]  %s664, 128, %s666, [#allocation4]
    $region25: #{tpu_custom_call.1} parent=1 // pred_fallthru
      _
    // Predicated region
    $region26: #{tpu_custom_call.1} parent=1 // pred_check
      _
    $region27: #{tpu_custom_call.1} parent=1 // pred_check_branch
      %670 = sbr.rel (0) target = $region29
    $region28: #{tpu_custom_call.1} parent=1 // pred_region
      %672 = dma.done [#allocation4], 128
    $region29: #{tpu_custom_call.1} parent=1 // pred_fallthru
      _
    %673 = vsyncpa [#allocation3], 1
    %674 = vsyncpa [#allocation6], 1
    %675 = vsyncpa [#allocation4], 1

</llo_original>
